<compile_context>
chip_gen: v6e
topology: v6e:2x2x1
jax: 0.10.0
libtpu: 0.0.40
codegen_flags: <defaults>
</compile_context>

<pallas_src>
import functools

import jax
import jax.numpy as jnp
import numpy as np
from jax.experimental import pallas as pl
from jax.experimental.pallas import tpu as pltpu

NEG_SLOPE = 0.2       # GATConv default negative_slope
MASK_VALUE = -1e30    # additive mask for non-edges


def gat_kernel(xw_slab_ref, misc_ref, out_ref, *, n, in_ch, heads, out_ch, w_off):
    hc = heads * out_ch
    hn = heads * n

    # --- unpack the two operand slabs (static, sublane-aligned slices) ---
    x = xw_slab_ref[0:n, :]                          # [N, IC]   bf16
    w = xw_slab_ref[w_off:w_off + in_ch, :]          # [IC, HC]  bf16

    adj_bias = misc_ref[0:hn, 0:n]                   # [H*N, N]  f32, 0 / -1e30
    blk = misc_ref[hn:2 * hn, 0:hc]                  # [H*N, HC] f32, 0/1 head-block indicator
    bias = misc_ref[2 * hn:2 * hn + 1, 0:hc]         # [1, HC]   f32
    ai_row = misc_ref[2 * hn + 1:2 * hn + 2, 0:hc]   # [1, HC]   f32 (target attention vector)
    aj_row = misc_ref[2 * hn + 2:2 * hn + 3, 0:hc]   # [1, HC]   f32 (source attention vector)

    # --- Theta x (bf16 MXU operands, f32 accumulation) ---
    xw = jnp.dot(x, w, preferred_element_type=jnp.float32)      # [N, HC] f32
    xw_b = xw.astype(jnp.bfloat16)

    # Block-diagonal per-head copy of Theta x: mask in f32, cast once.
    xw_tiled = jnp.concatenate([xw] * heads, axis=0)            # [H*N, HC] f32
    xw_bd = xw_tiled * blk                                      # f32 mask-mul (v5e friendly)
    xw_bd_b = xw_bd.astype(jnp.bfloat16)

    # Source-node logits as a column over the (head, source) row axis:
    #   a_j_col[h*N + j, 0] = <att_src[h], (Theta x)_j | head h>
    a_j_col = jnp.sum(xw_bd * aj_row, axis=1, keepdims=True)    # [H*N, 1] f32

    # Target-node logits broadcast across every (head, source) row with ONE
    # matmul: block-diagonal att_dst pattern @ (Theta x)^T.
    ai_pat_b = (ai_row * blk).astype(jnp.bfloat16)              # [H*N, HC] bf16
    a_i_big = jax.lax.dot_general(
        ai_pat_b, xw_b, (((1,), (1,)), ((), ())),
        preferred_element_type=jnp.float32)                     # [H*N, N] f32

    # --- edge scores + segment softmax (sources on sublanes, targets on lanes) ---
    e = a_i_big + a_j_col
    e = jnp.where(e > 0.0, e, NEG_SLOPE * e)                    # LeakyReLU
    e = e + adj_bias                                            # -1e30 on non-edges
    # Per-target global max (shared across heads).  Mathematically exact for
    # the per-head softmax (the shift cancels in the ratio); per-head max is
    # only needed if the inter-head logit spread approached the f32 exp
    # underflow range (~88), far from true at glorot scale.
    m = jnp.max(e, axis=0, keepdims=True)                       # [1, N]
    p = jnp.exp(e - m)                                          # [H*N, N]; masked -> 0
    p_b = p.astype(jnp.bfloat16)                                # single bf16 cast, reused below

    # Unnormalized per-head aggregation + lane concat in one matmul (p^T @ xw_bd).
    raw = jax.lax.dot_general(
        p_b, xw_bd_b, (((0,), (0,)), ((), ())),
        preferred_element_type=jnp.float32)                     # [N, HC] f32
    # Per-head denominators, already expanded across each head's C output lanes.
    denom_c = jax.lax.dot_general(
        p_b, blk.astype(jnp.bfloat16), (((0,), (0,)), ((), ())),
        preferred_element_type=jnp.float32)                     # [N, HC] f32
    inv_c = pl.reciprocal(denom_c, approx=True)                 # EUP, ~free slot

    out_ref[...] = raw * inv_c + bias


def gat_conv(xw_slab, misc_slab, *, n, in_ch, heads, out_ch, w_off):
    """Dense GATConv forward from the two pre-packed operand slabs."""
    hc = heads * out_ch
    kernel = functools.partial(gat_kernel, n=n, in_ch=in_ch, heads=heads,
                               out_ch=out_ch, w_off=w_off)
    return pl.pallas_call(
        kernel,
        out_shape=jax.ShapeDtypeStruct((n, hc), jnp.float32),
        in_specs=[pl.BlockSpec(memory_space=pltpu.MemorySpace.VMEM)] * 2,
        out_specs=pl.BlockSpec(memory_space=pltpu.MemorySpace.VMEM),
    )(xw_slab, misc_slab)


def prepare_gat_operands(embedding, weight, att, bias, adj, heads, out_channels):
    """One-time (per parameter update) host-side packing of all operands.

    Everything data-independent (attention vectors, block indicator, additive
    adjacency bias, bias row) is built here, outside the hot path, and packed
    with the parameters into 2 slabs -> 2 DMA descriptors for the kernel.
    """
    n, in_ch = embedding.shape
    c = out_channels
    hc = heads * c
    hn = heads * n
    assert in_ch == hc and weight.shape == (in_ch, hc)

    # bf16 parameter slab: rows [0:n) = embedding, [w_off:w_off+in_ch) = weight.
    w_off = ((n + 15) // 16) * 16            # keep bf16 packed-pair alignment
    xw_slab = jnp.zeros((w_off + in_ch, hc), jnp.bfloat16)
    xw_slab = xw_slab.at[0:n, :].set(embedding.astype(jnp.bfloat16))
    xw_slab = xw_slab.at[w_off:w_off + in_ch, :].set(weight.astype(jnp.bfloat16))

    # f32 misc slab: adjacency bias (source-major), head-block indicator,
    # bias row, att_dst row, att_src row.
    cols = max(n, hc)
    att = att.astype(jnp.float32)
    ai_row = att[0, :, :c].reshape(hc)                       # att_dst, head-major
    aj_row = att[0, :, c:].reshape(hc)                       # att_src, head-major
    base = jnp.where(adj > 0, 0.0, MASK_VALUE).astype(jnp.float32)   # [tgt, src]
    adj_bias_t = jnp.tile(base.T, (heads, 1))                        # [H*N src, N tgt]
    blk = jnp.repeat(jnp.repeat(jnp.eye(heads, dtype=jnp.float32), n, axis=0),
                     c, axis=1)                                      # [H*N, HC]

    misc = jnp.zeros((2 * hn + 3, cols), jnp.float32)
    misc = misc.at[0:hn, 0:n].set(adj_bias_t)
    misc = misc.at[hn:2 * hn, 0:hc].set(blk)
    misc = misc.at[2 * hn, 0:hc].set(bias.astype(jnp.float32))
    misc = misc.at[2 * hn + 1, 0:hc].set(ai_row)
    misc = misc.at[2 * hn + 2, 0:hc].set(aj_row)

    dims = dict(n=n, in_ch=in_ch, heads=heads, out_ch=c, w_off=w_off)
    return xw_slab, misc, dims


def gat_reference(emb, weight, att, bias, adj, heads, out_channels):
    """Pure-JAX dense reference matching GATConv semantics (f32)."""
    n = emb.shape[0]
    xw = emb @ weight
    x = xw.reshape(n, heads, out_channels)
    att_i = att[0, :, :out_channels]
    att_j = att[0, :, out_channels:]
    ai = jnp.einsum('nhc,hc->nh', x, att_i)
    aj = jnp.einsum('nhc,hc->nh', x, att_j)
    e = ai[:, None, :] + aj[None, :, :]                 # [N_tgt, N_src, H]
    e = jnp.where(e > 0, e, NEG_SLOPE * e)
    mask = (adj > 0)[:, :, None]
    e = jnp.where(mask, e, -1e30)
    e = e - e.max(axis=1, keepdims=True)
    p = jnp.where(mask, jnp.exp(e), 0.0)
    alpha = p / p.sum(axis=1, keepdims=True)
    out = jnp.einsum('nmh,mhc->nhc', alpha, x).reshape(n, heads * out_channels)
    return out + bias


if __name__ == "__main__":
    key = jax.random.PRNGKey(0)

    # Small shapes consistent with OntologyEmbedding (in_channels == heads*out_channels)
    N = 32
    heads = 4
    out_channels = 8
    in_channels = heads * out_channels      # 32

    k_emb, k_w, k_att, k_map = jax.random.split(key, 4)

    def glorot(k, shape):
        fan = shape[-2] + shape[-1]
        a = float(np.sqrt(6.0 / fan))
        return jax.random.uniform(k, shape, jnp.float32, -a, a)

    # nn.Parameter inits (glorot for embedding / weight / att, zeros for bias)
    embedding = glorot(k_emb, (N, in_channels))
    weight = glorot(k_w, (in_channels, heads * out_channels))
    att = glorot(k_att, (1, heads, 2 * out_channels))
    bias = jnp.zeros((heads * out_channels,), jnp.float32)

    # Deterministic synthetic ontology tree (binary tree): parent<->child edges
    # (stand-in for build_stage_one_edges) plus self loops (add_self_loops).
    adj_np = np.zeros((N, N), np.float32)
    for i in range(1, N):
        par = (i - 1) // 2
        adj_np[i, par] = 1.0
        adj_np[par, i] = 1.0
    np.fill_diagonal(adj_np, 1.0)
    adj = jnp.asarray(adj_np)

    # One-time operand packing (hoisted out of the hot path), then one
    # jitted pallas_call for the GATConv forward.
    xw_slab, misc_slab, dims = prepare_gat_operands(
        embedding, weight, att, bias, adj, heads, out_channels)
    gat = jax.jit(functools.partial(gat_conv, **dims))

    out = jax.block_until_ready(gat(xw_slab, misc_slab))

    ref = gat_reference(embedding, weight, att, bias, adj, heads, out_channels)
    assert np.allclose(np.asarray(out), np.asarray(ref), atol=5e-2, rtol=5e-2), \
        "Pallas GAT output mismatch vs reference"

    # emb[self.idx_mapping] gather (glue, plain JAX): synthetic mapping of
    # 8 ontology paths of length 4 over the graph nodes.
    idx_mapping = jax.random.randint(k_map, (8, 4), 0, N)
    seq_emb = out[idx_mapping]              # [8, 4, in_channels]
    # TODO(synk): BiLSTM_Attention is referenced by OntologyEmbedding but its
    # definition is not part of the provided module source; the gathered GAT
    # embeddings `seq_emb` stand in for its input.
    jax.block_until_ready(seq_emb)

    print("KERNEL_OK")
</pallas_src>

<mosaic_0001>
module attributes {stable_mosaic.version = 11 : i64} {
  func.func @gat_kernel(%arg0: memref<64x32xbf16, #tpu.memory_space<vmem>>, %arg1: memref<259x32xf32, #tpu.memory_space<vmem>>, %arg2: memref<32x32xf32, #tpu.memory_space<vmem>>) attributes {dimension_semantics = [], scalar_prefetch = 0 : i64, scratch_operands = 0 : i64, tpu.core_type = #tpu.core_type<tc>} {
    %c0 = arith.constant 0 : index
    %c0_0 = arith.constant 0 : index
    %0 = vector.load %arg0[%c0, %c0_0] : memref<64x32xbf16, #tpu.memory_space<vmem>>, vector<32x32xbf16>
    %c32 = arith.constant 32 : index
    %c0_1 = arith.constant 0 : index
    %1 = vector.load %arg0[%c32, %c0_1] : memref<64x32xbf16, #tpu.memory_space<vmem>>, vector<32x32xbf16>
    %c0_2 = arith.constant 0 : index
    %c0_3 = arith.constant 0 : index
    %2 = vector.load %arg1[%c0_2, %c0_3] : memref<259x32xf32, #tpu.memory_space<vmem>>, vector<128x32xf32>
    %c128 = arith.constant 128 : index
    %c0_4 = arith.constant 0 : index
    %3 = vector.load %arg1[%c128, %c0_4] : memref<259x32xf32, #tpu.memory_space<vmem>>, vector<128x32xf32>
    %c256 = arith.constant 256 : index
    %c0_5 = arith.constant 0 : index
    %4 = vector.load %arg1[%c256, %c0_5] : memref<259x32xf32, #tpu.memory_space<vmem>>, vector<1x32xf32>
    %c257 = arith.constant 257 : index
    %c0_6 = arith.constant 0 : index
    %5 = vector.load %arg1[%c257, %c0_6] : memref<259x32xf32, #tpu.memory_space<vmem>>, vector<1x32xf32>
    %c258 = arith.constant 258 : index
    %c0_7 = arith.constant 0 : index
    %6 = vector.load %arg1[%c258, %c0_7] : memref<259x32xf32, #tpu.memory_space<vmem>>, vector<1x32xf32>
    %cst = arith.constant dense<0.000000e+00> : vector<32x32xf32>
    %7 = tpu.matmul %0, %1, %cst {dimension_numbers = #tpu.dot_dimension_numbers<[1], [0], [0], [1], [0, 0, 1, 1], [], []>} : vector<32x32xbf16>, vector<32x32xbf16>, vector<32x32xf32> -> vector<32x32xf32>
    %8 = arith.truncf %7 : vector<32x32xf32> to vector<32x32xbf16>
    %9 = tpu.concatenate %7, %7, %7, %7 in 0 : vector<32x32xf32>, vector<32x32xf32>, vector<32x32xf32>, vector<32x32xf32> -> vector<128x32xf32>
    %10 = arith.mulf %9, %3 : vector<128x32xf32>
    %11 = arith.truncf %10 : vector<128x32xf32> to vector<128x32xbf16>
    %12 = vector.broadcast %6 : vector<1x32xf32> to vector<128x32xf32>
    %13 = arith.mulf %10, %12 : vector<128x32xf32>
    %cst_8 = arith.constant dense<0.000000e+00> : vector<128xf32>
    %14 = vector.multi_reduction <add>, %13, %cst_8 [1] : vector<128x32xf32> to vector<128xf32>
    %15 = vector.shape_cast %14 : vector<128xf32> to vector<128x1xf32>
    %16 = vector.broadcast %5 : vector<1x32xf32> to vector<128x32xf32>
    %17 = arith.mulf %16, %3 : vector<128x32xf32>
    %18 = arith.truncf %17 : vector<128x32xf32> to vector<128x32xbf16>
    %cst_9 = arith.constant dense<0.000000e+00> : vector<128x32xf32>
    %19 = tpu.matmul %18, %8, %cst_9 {dimension_numbers = #tpu.dot_dimension_numbers<[1], [1], [0], [0], [0, 0, 1, 0], [], []>} : vector<128x32xbf16>, vector<32x32xbf16>, vector<128x32xf32> -> vector<128x32xf32>
    %20 = vector.broadcast %15 : vector<128x1xf32> to vector<128x32xf32>
    %21 = arith.addf %19, %20 : vector<128x32xf32>
    %cst_10 = arith.constant 0.000000e+00 : f32
    %22 = vector.broadcast %cst_10 : f32 to vector<128x32xf32>
    %23 = arith.cmpf ogt, %21, %22 : vector<128x32xf32>
    %cst_11 = arith.constant 2.000000e-01 : f32
    %24 = vector.broadcast %cst_11 : f32 to vector<128x32xf32>
    %25 = arith.mulf %24, %21 : vector<128x32xf32>
    %26 = arith.select %23, %21, %25 : vector<128x32xi1>, vector<128x32xf32>
    %27 = arith.addf %26, %2 : vector<128x32xf32>
    %cst_12 = arith.constant dense<0xFF800000> : vector<32xf32>
    %28 = vector.multi_reduction <maximumf>, %27, %cst_12 [0] : vector<128x32xf32> to vector<32xf32>
    %29 = vector.shape_cast %28 : vector<32xf32> to vector<1x32xf32>
    %30 = vector.broadcast %29 : vector<1x32xf32> to vector<128x32xf32>
    %31 = arith.subf %27, %30 : vector<128x32xf32>
    %32 = math.exp %31 : vector<128x32xf32>
    %33 = arith.truncf %32 : vector<128x32xf32> to vector<128x32xbf16>
    %cst_13 = arith.constant dense<0.000000e+00> : vector<32x32xf32>
    %34 = tpu.matmul %33, %11, %cst_13 {dimension_numbers = #tpu.dot_dimension_numbers<[0], [0], [1], [1], [0, 1, 1, 1], [], []>} : vector<128x32xbf16>, vector<128x32xbf16>, vector<32x32xf32> -> vector<32x32xf32>
    %35 = arith.truncf %3 : vector<128x32xf32> to vector<128x32xbf16>
    %cst_14 = arith.constant dense<0.000000e+00> : vector<32x32xf32>
    %36 = tpu.matmul %33, %35, %cst_14 {dimension_numbers = #tpu.dot_dimension_numbers<[0], [0], [1], [1], [0, 1, 1, 1], [], []>} : vector<128x32xbf16>, vector<128x32xbf16>, vector<32x32xf32> -> vector<32x32xf32>
    %37 = tpu.reciprocal %36 {approx = true} : vector<32x32xf32> -> vector<32x32xf32>
    %38 = arith.mulf %34, %37 : vector<32x32xf32>
    %39 = vector.broadcast %4 : vector<1x32xf32> to vector<32x32xf32>
    %40 = arith.addf %38, %39 : vector<32x32xf32>
    %c0_15 = arith.constant 0 : index
    %c0_16 = arith.constant 0 : index
    %41 = vector.load %arg2[%c0_15, %c0_16] : memref<32x32xf32, #tpu.memory_space<vmem>>, vector<32x32xf32>
    tpu.vector_store %arg2[%c0_15, %c0_16], %40 {strides = array<i32>} : memref<32x32xf32, #tpu.memory_space<vmem>>, vector<32x32xf32>,
    return
  }
}

</mosaic_0001>

<llo_original>
// kernel: gat_conv.1
$region0: #{gat_conv.1}
  #allocation0 [shape = 'u32[]', space=smem, size = 0x4, offset = 0x4, fixed_abs, tag = 'smem constant byte address 0x4 - core index']
  #allocation1 [shape = 'u32[144,128]{1,0:T(1,128)}', space=vmem, size = 0x12000, scoped, tag = 'internal scratch']
  %s0 = inlined_call_operand.vmem [shape: bf16[64,32], index: 0, kind: input, shape index: {}]
  %s1 = inlined_call_operand.vmem [shape: f32[259,32], index: 1, kind: input, shape index: {}]
  %s2 = inlined_call_operand.hbm [shape: f32[32,32], index: 2, kind: output, shape index: {}]
  %s3 = sld [smem:[#allocation0]]
  $region18: #{gat_conv.1} parent=0
    _
  %s5 = ssub.s32 1, %s3
  %s6 = scalar_select 0, %s5, %s3
  $region1: #{gat_conv.1} parent=0
    #allocation2 [shape = 'u8[16384]{0}', space=vmem, size = 0x4000, scoped, tag = 'output window, operand 0, single buffered']
    #allocation3 [shape = 's32[1]{0}', space=sflag, size = 0x4, scoped, tag = 'scoped memory for gat_conv.1']
    %7 = vsyncpa [#allocation3], 0
    // Predicated region
    $region2: #{gat_conv.1} parent=1 // pred_check
      _
    $region3: #{gat_conv.1} parent=1 // pred_check_branch
      %9 = sbr.rel (0) target = $region5
    $region4: #{gat_conv.1} parent=1 // pred_region
      _
    $region5: #{gat_conv.1} parent=1 // pred_fallthru
      _
    // Predicated region
    $region6: #{gat_conv.1} parent=1 // pred_check
      _
    $region7: #{gat_conv.1} parent=1 // pred_check_branch
      %11 = sbr.rel (0) target = $region9
    $region8: #{gat_conv.1} parent=1 // pred_region
      _
    $region9: #{gat_conv.1} parent=1 // pred_fallthru
      _
    %v13 = vld [vmem:[%s0] sm:$0xf]
    %v14 = vld [vmem:[%s0 + $0x4] sm:$0xf]
    %v15 = vld [vmem:[%s0 + $0x8] sm:$0xf]
    %v16 = vld [vmem:[%s0 + $0xc] sm:$0xf]
    %v17 = vld [vmem:[%s0 + $0x10] sm:$0xf]
    %v18 = vld [vmem:[%s0 + $0x14] sm:$0xf]
    %v19 = vld [vmem:[%s0 + $0x18] sm:$0xf]
    %v20 = vld [vmem:[%s0 + $0x1c] sm:$0xf]
    %v21 = vld [vmem:[%s1] sm:$0xff]
    %v22 = vld [vmem:[%s1 + $0x8] sm:$0xff]
    %v23 = vld [vmem:[%s1 + $0x10] sm:$0xff]
    %v24 = vld [vmem:[%s1 + $0x18] sm:$0xff]
    %v25 = vld [vmem:[%s1 + $0x20] sm:$0xff]
    %v26 = vld [vmem:[%s1 + $0x28] sm:$0xff]
    %v27 = vld [vmem:[%s1 + $0x30] sm:$0xff]
    %v28 = vld [vmem:[%s1 + $0x38] sm:$0xff]
    %v29 = vld [vmem:[%s1 + $0x40] sm:$0xff]
    %v30 = vld [vmem:[%s1 + $0x48] sm:$0xff]
    %v31 = vld [vmem:[%s1 + $0x50] sm:$0xff]
    %v32 = vld [vmem:[%s1 + $0x58] sm:$0xff]
    %v33 = vld [vmem:[%s1 + $0x60] sm:$0xff]
    %v34 = vld [vmem:[%s1 + $0x68] sm:$0xff]
    %v35 = vld [vmem:[%s1 + $0x70] sm:$0xff]
    %v36 = vld [vmem:[%s1 + $0x78] sm:$0xff]
    %v37 = vld [vmem:[%s1 + $0x80] sm:$0xff]
    %v38 = vld [vmem:[%s1 + $0x88] sm:$0xff]
    %v39 = vld [vmem:[%s1 + $0x90] sm:$0xff]
    %v40 = vld [vmem:[%s1 + $0x98] sm:$0xff]
    %v41 = vld [vmem:[%s1 + $0xa0] sm:$0xff]
    %v42 = vld [vmem:[%s1 + $0xa8] sm:$0xff]
    %v43 = vld [vmem:[%s1 + $0xb0] sm:$0xff]
    %v44 = vld [vmem:[%s1 + $0xb8] sm:$0xff]
    %v45 = vld [vmem:[%s1 + $0xc0] sm:$0xff]
    %v46 = vld [vmem:[%s1 + $0xc8] sm:$0xff]
    %v47 = vld [vmem:[%s1 + $0xd0] sm:$0xff]
    %v48 = vld [vmem:[%s1 + $0xd8] sm:$0xff]
    %v49 = vld [vmem:[%s1 + $0xe0] sm:$0xff]
    %v50 = vld [vmem:[%s1 + $0xe8] sm:$0xff]
    %v51 = vld [vmem:[%s1 + $0xf0] sm:$0xff]
    %v52 = vld [vmem:[%s1 + $0xf8] sm:$0xff]
    %v53 = vld [vmem:[%s1 + $0x100] sm:$0x1]
    %v54 = vld [vmem:[%s1 + $0x101] sm:$0x1]
    %v55 = vld [vmem:[%s1 + $0x102] sm:$0x1]
    %v60 = vunpack.c.l.b16 %v13
    %v61 = vunpack.c.l.b16 %v14
    %v62 = vunpack.c.l.b16 %v15
    %v63 = vunpack.c.l.b16 %v16
    %v64 = vpack.c.b16 %v61, %v60
    %v65 = vpack.c.b16 %v63, %v62
    %v70 = vunpack.c.l.b16 %v17
    %v71 = vunpack.c.l.b16 %v18
    %v72 = vunpack.c.l.b16 %v19
    %v73 = vunpack.c.l.b16 %v20
    %v74 = vpack.c.b16 %v71, %v70
    %v75 = vpack.c.b16 %v73, %v72
    %vm78 = vcmask 261120
    %v80 = vsel %vm78, %v64, 0
    %v83 = vsel %vm78, %v65, 0
    %85 = vmatprep.subr.bf16.mxu0 0
    %86 = vmatpush1.bf16.msra.mxu0 0
    %87 = vmatprep.subr.bf16.mxu0 0
    %88 = vmatpush1.bf16.msra.mxu0 0
    %89 = vmatprep.subr.bf16.mxu0 0
    %90 = vmatpush1.bf16.msra.mxu0 0
    %91 = vmatprep.subr.bf16.mxu0 0
    %92 = vmatpush1.bf16.msra.mxu0 0
    %93 = vmatprep.subr.bf16.mxu0 0
    %94 = vmatpush1.bf16.msra.mxu0 0
    %95 = vmatprep.subr.bf16.mxu0 0
    %96 = vmatpush1.bf16.msra.mxu0 0
    %97 = vmatprep.subr.bf16.mxu0 0
    %98 = vmatpush1.bf16.msra.mxu0 %v75
    %99 = vmatprep.subr.bf16.mxu0 0
    %100 = vmatpush1.bf16.msra.mxu0 %v74
    %101 = vmatprep.subr.bf16.mxu0 0
    %102 = vmatpush2.bf16.msra.mxu0 0
    %103 = vmatprep.subr.bf16.mxu0 0
    %104 = vmatpush2.bf16.msra.mxu0 0
    %105 = vmatprep.subr.bf16.mxu0 0
    %106 = vmatpush2.bf16.msra.mxu0 0
    %107 = vmatprep.subr.bf16.mxu0 0
    %108 = vmatpush2.bf16.msra.mxu0 0
    %109 = vmatprep.subr.bf16.mxu0 0
    %110 = vmatpush2.bf16.msra.mxu0 0
    %111 = vmatprep.subr.bf16.mxu0 0
    %112 = vmatpush2.bf16.msra.mxu0 0
    %113 = vmatprep.subr.bf16.mxu0 0
    %114 = vmatpush2.bf16.msra.mxu0 0
    %115 = vmatprep.subr.bf16.mxu0 0
    %116 = vmatpush2.bf16.msra.mxu0 0
    %117 = vmatprep.mubr.bf16.mxu0 0
    %118 = vmatmul.mubr.bf16.gmra.mxu0 %v80
    %v119 = vpop.f32.mrf.mxu0
    %v120 = vadd.f32 0.0, %v119
    %v121 = vpop.f32.mrf.mxu0
    %v122 = vpop.f32.mrf.mxu0
    %v123 = vadd.f32 0.0, %v122
    %v124 = vpop.f32.mrf.mxu0
    %125 = vmatprep.mubr.bf16.mxu0 0
    %126 = vmatmul.mubr.bf16.gmra.mxu0 %v83
    %v127 = vpop.f32.mrf.mxu0
    %v128 = vadd.f32 0.0, %v127
    %v129 = vpop.f32.mrf.mxu0
    %v130 = vpop.f32.mrf.mxu0
    %v131 = vadd.f32 0.0, %v130
    %v132 = vpop.f32.mrf.mxu0
    %133 = vdwg.mxu0
    %v134 = vpack.c.bf16 %v123, %v120
    %v135 = vpack.c.bf16 %v131, %v128
    %v136 = vmul.f32 %v120, %v37
    %v137 = vmul.f32 %v123, %v38
    %v138 = vmul.f32 %v128, %v39
    %v139 = vmul.f32 %v131, %v40
    %v140 = vmul.f32 %v120, %v41
    %v141 = vmul.f32 %v123, %v42
    %v142 = vmul.f32 %v128, %v43
    %v143 = vmul.f32 %v131, %v44
    %v144 = vmul.f32 %v120, %v45
    %v145 = vmul.f32 %v123, %v46
    %v146 = vmul.f32 %v128, %v47
    %v147 = vmul.f32 %v131, %v48
    %v148 = vmul.f32 %v120, %v49
    %v149 = vmul.f32 %v123, %v50
    %v150 = vmul.f32 %v128, %v51
    %v151 = vmul.f32 %v131, %v52
    %v152 = vpack.c.bf16 %v137, %v136
    %v153 = vpack.c.bf16 %v139, %v138
    %v154 = vpack.c.bf16 %v141, %v140
    %v155 = vpack.c.bf16 %v143, %v142
    %v156 = vpack.c.bf16 %v145, %v144
    %v157 = vpack.c.bf16 %v147, %v146
    %v158 = vpack.c.bf16 %v149, %v148
    %v159 = vpack.c.bf16 %v151, %v150
    %v160 = vlaneseq
    %v161 = vshrl.u32 %v160, 7
    %v162 = vsub.s32 0, %v161
    %v163 = vrot.slane %v55, %v162
    %v164 = vmul.f32 %v136, %v163
    %v165 = vmul.f32 %v137, %v163
    %v166 = vmul.f32 %v138, %v163
    %v167 = vmul.f32 %v139, %v163
    %v168 = vmul.f32 %v140, %v163
    %v169 = vmul.f32 %v141, %v163
    %v170 = vmul.f32 %v142, %v163
    %v171 = vmul.f32 %v143, %v163
    %v172 = vmul.f32 %v144, %v163
    %v173 = vmul.f32 %v145, %v163
    %v174 = vmul.f32 %v146, %v163
    %v175 = vmul.f32 %v147, %v163
    %v176 = vmul.f32 %v148, %v163
    %v177 = vmul.f32 %v149, %v163
    %v178 = vmul.f32 %v150, %v163
    %v179 = vmul.f32 %v151, %v163
    %v180 = vsel %vm78, %v164, 0.0
    %181 = vadd.xlane.f32.xlu0 %v180
    %v182 = vpop.xlane.xlu0 %181
    %v183 = vsel %vm78, %v165, 0.0
    %184 = vadd.xlane.f32.xlu0 %v183
    %v185 = vpop.xlane.xlu0 %184
    %v186 = vsel %vm78, %v166, 0.0
    %187 = vadd.xlane.f32.xlu0 %v186
    %v188 = vpop.xlane.xlu0 %187
    %v189 = vsel %vm78, %v167, 0.0
    %190 = vadd.xlane.f32.xlu0 %v189
    %v191 = vpop.xlane.xlu0 %190
    %v192 = vsel %vm78, %v168, 0.0
    %193 = vadd.xlane.f32.xlu0 %v192
    %v194 = vpop.xlane.xlu0 %193
    %v195 = vsel %vm78, %v169, 0.0
    %196 = vadd.xlane.f32.xlu0 %v195
    %v197 = vpop.xlane.xlu0 %196
    %v198 = vsel %vm78, %v170, 0.0
    %199 = vadd.xlane.f32.xlu0 %v198
    %v200 = vpop.xlane.xlu0 %199
    %v201 = vsel %vm78, %v171, 0.0
    %202 = vadd.xlane.f32.xlu0 %v201
    %v203 = vpop.xlane.xlu0 %202
    %v204 = vsel %vm78, %v172, 0.0
    %205 = vadd.xlane.f32.xlu0 %v204
    %v206 = vpop.xlane.xlu0 %205
    %v207 = vsel %vm78, %v173, 0.0
    %208 = vadd.xlane.f32.xlu0 %v207
    %v209 = vpop.xlane.xlu0 %208
    %v210 = vsel %vm78, %v174, 0.0
    %211 = vadd.xlane.f32.xlu0 %v210
    %v212 = vpop.xlane.xlu0 %211
    %v213 = vsel %vm78, %v175, 0.0
    %214 = vadd.xlane.f32.xlu0 %v213
    %v215 = vpop.xlane.xlu0 %214
    %v216 = vsel %vm78, %v176, 0.0
    %217 = vadd.xlane.f32.xlu0 %v216
    %v218 = vpop.xlane.xlu0 %217
    %v219 = vsel %vm78, %v177, 0.0
    %220 = vadd.xlane.f32.xlu0 %v219
    %v221 = vpop.xlane.xlu0 %220
    %v222 = vsel %vm78, %v178, 0.0
    %223 = vadd.xlane.f32.xlu0 %v222
    %v224 = vpop.xlane.xlu0 %223
    %v225 = vsel %vm78, %v179, 0.0
    %226 = vadd.xlane.f32.xlu0 %v225
    %v227 = vpop.xlane.xlu0 %226
    %v228 = vlaneseq
    %v229 = vshrl.u32 %v228, 7
    %v230 = vsub.s32 0, %v229
    %v231 = vrot.slane %v54, %v230
    %v232 = vmul.f32 %v231, %v37
    %v233 = vmul.f32 %v231, %v38
    %v234 = vmul.f32 %v231, %v39
    %v235 = vmul.f32 %v231, %v40
    %v236 = vmul.f32 %v231, %v41
    %v237 = vmul.f32 %v231, %v42
    %v238 = vmul.f32 %v231, %v43
    %v239 = vmul.f32 %v231, %v44
    %v240 = vmul.f32 %v231, %v45
    %v241 = vmul.f32 %v231, %v46
    %v242 = vmul.f32 %v231, %v47
    %v243 = vmul.f32 %v231, %v48
    %v244 = vmul.f32 %v231, %v49
    %v245 = vmul.f32 %v231, %v50
    %v246 = vmul.f32 %v231, %v51
    %v247 = vmul.f32 %v231, %v52
    %v248 = vpack.c.bf16 %v233, %v232
    %v249 = vpack.c.bf16 %v235, %v234
    %v250 = vpack.c.bf16 %v237, %v236
    %v251 = vpack.c.bf16 %v239, %v238
    %v252 = vpack.c.bf16 %v241, %v240
    %v253 = vpack.c.bf16 %v243, %v242
    %v254 = vpack.c.bf16 %v245, %v244
    %v255 = vpack.c.bf16 %v247, %v246
    %v257 = vsel %vm78, %v248, 0
    %v260 = vsel %vm78, %v249, 0
    %v263 = vsel %vm78, %v250, 0
    %v266 = vsel %vm78, %v251, 0
    %v269 = vsel %vm78, %v252, 0
    %v272 = vsel %vm78, %v253, 0
    %v275 = vsel %vm78, %v254, 0
    %v278 = vsel %vm78, %v255, 0
    %v281 = vsel %vm78, %v134, 0
    %v284 = vsel %vm78, %v135, 0
    %286 = vmatprep.subr.bf16.mxu0 0
    %287 = vmatpush1.bf16.xpose.msra.mxu0 0
    %288 = vmatprep.subr.bf16.mxu0 0
    %289 = vmatpush1.bf16.xpose.msra.mxu0 0
    %290 = vmatprep.subr.bf16.mxu0 0
    %291 = vmatpush1.bf16.xpose.msra.mxu0 0
    %292 = vmatprep.subr.bf16.mxu0 0
    %293 = vmatpush1.bf16.xpose.msra.mxu0 0
    %294 = vmatprep.subr.bf16.mxu0 0
    %295 = vmatpush1.bf16.xpose.msra.mxu0 0
    %296 = vmatprep.subr.bf16.mxu0 0
    %297 = vmatpush1.bf16.xpose.msra.mxu0 0
    %298 = vmatprep.subr.bf16.mxu0 0
    %299 = vmatpush1.bf16.xpose.msra.mxu0 %v284
    %300 = vmatprep.subr.bf16.mxu0 0
    %301 = vmatpush1.bf16.xpose.msra.mxu0 %v281
    %302 = vmatprep.subr.bf16.mxu0 0
    %303 = vmatpush2.bf16.xpose.msra.mxu0 0
    %304 = vmatprep.subr.bf16.mxu0 0
    %305 = vmatpush2.bf16.xpose.msra.mxu0 0
    %306 = vmatprep.subr.bf16.mxu0 0
    %307 = vmatpush2.bf16.xpose.msra.mxu0 0
    %308 = vmatprep.subr.bf16.mxu0 0
    %309 = vmatpush2.bf16.xpose.msra.mxu0 0
    %310 = vmatprep.subr.bf16.mxu0 0
    %311 = vmatpush2.bf16.xpose.msra.mxu0 0
    %312 = vmatprep.subr.bf16.mxu0 0
    %313 = vmatpush2.bf16.xpose.msra.mxu0 0
    %314 = vmatprep.subr.bf16.mxu0 0
    %315 = vmatpush2.bf16.xpose.msra.mxu0 0
    %316 = vmatprep.subr.bf16.mxu0 0
    %317 = vmatpush2.bf16.xpose.msra.mxu0 0
    %318 = vmatprep.mubr.bf16.mxu0 0
    %319 = vmatmul.mubr.bf16.gmra.mxu0 %v257
    %v320 = vpop.f32.mrf.mxu0
    %v321 = vadd.f32 %v182, %v320
    %v322 = vpop.f32.mrf.mxu0
    %v323 = vpop.f32.mrf.mxu0
    %v324 = vadd.f32 %v185, %v323
    %v325 = vpop.f32.mrf.mxu0
    %326 = vmatprep.mubr.bf16.mxu0 0
    %327 = vmatmul.mubr.bf16.gmra.mxu0 %v260
    %v328 = vpop.f32.mrf.mxu0
    %v329 = vadd.f32 %v188, %v328
    %v330 = vpop.f32.mrf.mxu0
    %v331 = vpop.f32.mrf.mxu0
    %v332 = vadd.f32 %v191, %v331
    %v333 = vpop.f32.mrf.mxu0
    %334 = vmatprep.mubr.bf16.mxu0 0
    %335 = vmatmul.mubr.bf16.gmra.mxu0 %v263
    %v336 = vpop.f32.mrf.mxu0
    %v337 = vadd.f32 %v194, %v336
    %v338 = vpop.f32.mrf.mxu0
    %v339 = vpop.f32.mrf.mxu0
    %v340 = vadd.f32 %v197, %v339
    %v341 = vpop.f32.mrf.mxu0
    %342 = vmatprep.mubr.bf16.mxu0 0
    %343 = vmatmul.mubr.bf16.gmra.mxu0 %v266
    %v344 = vpop.f32.mrf.mxu0
    %v345 = vadd.f32 %v200, %v344
    %v346 = vpop.f32.mrf.mxu0
    %v347 = vpop.f32.mrf.mxu0
    %v348 = vadd.f32 %v203, %v347
    %v349 = vpop.f32.mrf.mxu0
    %350 = vmatprep.mubr.bf16.mxu0 0
    %351 = vmatmul.mubr.bf16.gmra.mxu0 %v269
    %v352 = vpop.f32.mrf.mxu0
    %v353 = vadd.f32 %v206, %v352
    %v354 = vpop.f32.mrf.mxu0
    %v355 = vpop.f32.mrf.mxu0
    %v356 = vadd.f32 %v209, %v355
    %v357 = vpop.f32.mrf.mxu0
    %358 = vmatprep.mubr.bf16.mxu0 0
    %359 = vmatmul.mubr.bf16.gmra.mxu0 %v272
    %v360 = vpop.f32.mrf.mxu0
    %v361 = vadd.f32 %v212, %v360
    %v362 = vpop.f32.mrf.mxu0
    %v363 = vpop.f32.mrf.mxu0
    %v364 = vadd.f32 %v215, %v363
    %v365 = vpop.f32.mrf.mxu0
    %366 = vmatprep.mubr.bf16.mxu0 0
    %367 = vmatmul.mubr.bf16.gmra.mxu0 %v275
    %v368 = vpop.f32.mrf.mxu0
    %v369 = vadd.f32 %v218, %v368
    %v370 = vpop.f32.mrf.mxu0
    %v371 = vpop.f32.mrf.mxu0
    %v372 = vadd.f32 %v221, %v371
    %v373 = vpop.f32.mrf.mxu0
    %374 = vmatprep.mubr.bf16.mxu0 0
    %375 = vmatmul.mubr.bf16.gmra.mxu0 %v278
    %v376 = vpop.f32.mrf.mxu0
    %v377 = vadd.f32 %v224, %v376
    %v378 = vpop.f32.mrf.mxu0
    %v379 = vpop.f32.mrf.mxu0
    %v380 = vadd.f32 %v227, %v379
    %v381 = vpop.f32.mrf.mxu0
    %382 = vdwg.mxu0
    %vm383 = vcmp.gt.f32.partialorder %v321, 0.0
    %vm384 = vcmp.gt.f32.partialorder %v324, 0.0
    %vm385 = vcmp.gt.f32.partialorder %v329, 0.0
    %vm386 = vcmp.gt.f32.partialorder %v332, 0.0
    %vm387 = vcmp.gt.f32.partialorder %v337, 0.0
    %vm388 = vcmp.gt.f32.partialorder %v340, 0.0
    %vm389 = vcmp.gt.f32.partialorder %v345, 0.0
    %vm390 = vcmp.gt.f32.partialorder %v348, 0.0
    %vm391 = vcmp.gt.f32.partialorder %v353, 0.0
    %vm392 = vcmp.gt.f32.partialorder %v356, 0.0
    %vm393 = vcmp.gt.f32.partialorder %v361, 0.0
    %vm394 = vcmp.gt.f32.partialorder %v364, 0.0
    %vm395 = vcmp.gt.f32.partialorder %v369, 0.0
    %vm396 = vcmp.gt.f32.partialorder %v372, 0.0
    %vm397 = vcmp.gt.f32.partialorder %v377, 0.0
    %vm398 = vcmp.gt.f32.partialorder %v380, 0.0
    %v399 = vmul.f32 %v321, 0.2
    %v400 = vmul.f32 %v324, 0.2
    %v401 = vmul.f32 %v329, 0.2
    %v402 = vmul.f32 %v332, 0.2
    %v403 = vmul.f32 %v337, 0.2
    %v404 = vmul.f32 %v340, 0.2
    %v405 = vmul.f32 %v345, 0.2
    %v406 = vmul.f32 %v348, 0.2
    %v407 = vmul.f32 %v353, 0.2
    %v408 = vmul.f32 %v356, 0.2
    %v409 = vmul.f32 %v361, 0.2
    %v410 = vmul.f32 %v364, 0.2
    %v411 = vmul.f32 %v369, 0.2
    %v412 = vmul.f32 %v372, 0.2
    %v413 = vmul.f32 %v377, 0.2
    %v414 = vmul.f32 %v380, 0.2
    %v415 = vsel %vm383, %v321, %v399
    %v416 = vsel %vm384, %v324, %v400
    %v417 = vsel %vm385, %v329, %v401
    %v418 = vsel %vm386, %v332, %v402
    %v419 = vsel %vm387, %v337, %v403
    %v420 = vsel %vm388, %v340, %v404
    %v421 = vsel %vm389, %v345, %v405
    %v422 = vsel %vm390, %v348, %v406
    %v423 = vsel %vm391, %v353, %v407
    %v424 = vsel %vm392, %v356, %v408
    %v425 = vsel %vm393, %v361, %v409
    %v426 = vsel %vm394, %v364, %v410
    %v427 = vsel %vm395, %v369, %v411
    %v428 = vsel %vm396, %v372, %v412
    %v429 = vsel %vm397, %v377, %v413
    %v430 = vsel %vm398, %v380, %v414
    %v431 = vadd.f32 %v415, %v21
    %v432 = vadd.f32 %v416, %v22
    %v433 = vadd.f32 %v417, %v23
    %v434 = vadd.f32 %v418, %v24
    %v435 = vadd.f32 %v419, %v25
    %v436 = vadd.f32 %v420, %v26
    %v437 = vadd.f32 %v421, %v27
    %v438 = vadd.f32 %v422, %v28
    %v439 = vadd.f32 %v423, %v29
    %v440 = vadd.f32 %v424, %v30
    %v441 = vadd.f32 %v425, %v31
    %v442 = vadd.f32 %v426, %v32
    %v443 = vadd.f32 %v427, %v33
    %v444 = vadd.f32 %v428, %v34
    %v445 = vadd.f32 %v429, %v35
    %v446 = vadd.f32 %v430, %v36
    %v447 = vsel %vm78, %v431, -inf
    %v448 = vsel %vm78, %v432, -inf
    %v449 = vsel %vm78, %v433, -inf
    %v450 = vsel %vm78, %v434, -inf
    %v451 = vsel %vm78, %v435, -inf
    %v452 = vmax.f32 %v447, %v451
    %v453 = vsel %vm78, %v436, -inf
    %v454 = vmax.f32 %v448, %v453
    %v455 = vsel %vm78, %v437, -inf
    %v456 = vmax.f32 %v449, %v455
    %v457 = vsel %vm78, %v438, -inf
    %v458 = vmax.f32 %v450, %v457
    %v459 = vsel %vm78, %v439, -inf
    %v460 = vmax.f32 %v452, %v459
    %v461 = vsel %vm78, %v440, -inf
    %v462 = vmax.f32 %v454, %v461
    %v463 = vsel %vm78, %v441, -inf
    %v464 = vmax.f32 %v456, %v463
    %v465 = vsel %vm78, %v442, -inf
    %v466 = vmax.f32 %v458, %v465
    %v467 = vsel %vm78, %v443, -inf
    %v468 = vmax.f32 %v460, %v467
    %v469 = vsel %vm78, %v444, -inf
    %v470 = vmax.f32 %v462, %v469
    %v471 = vsel %vm78, %v445, -inf
    %v472 = vmax.f32 %v464, %v471
    %v473 = vsel %vm78, %v446, -inf
    %v474 = vmax.f32 %v466, %v473
    %v475 = vmax.f32 %v468, %v470
    %v476 = vmax.f32 %v472, %v474
    %v477 = vmax.f32 %v475, %v476
    %v478 = vrot.slane %v477, 4
    %v479 = vmax.f32 %v477, %v478
    %v480 = vrot.slane %v479, 2
    %v481 = vmax.f32 %v479, %v480
    %v482 = vrot.slane %v481, 1
    %v483 = vmax.f32 %v481, %v482
    %v484 = vsub.f32 %v431, %v483
    %v485 = vsub.f32 %v432, %v483
    %v486 = vsub.f32 %v433, %v483
    %v487 = vsub.f32 %v434, %v483
    %v488 = vsub.f32 %v435, %v483
    %v489 = vsub.f32 %v436, %v483
    %v490 = vsub.f32 %v437, %v483
    %v491 = vsub.f32 %v438, %v483
    %v492 = vsub.f32 %v439, %v483
    %v493 = vsub.f32 %v440, %v483
    %v494 = vsub.f32 %v441, %v483
    %v495 = vsub.f32 %v442, %v483
    %v496 = vsub.f32 %v443, %v483
    %v497 = vsub.f32 %v444, %v483
    %v498 = vsub.f32 %v445, %v483
    %v499 = vsub.f32 %v446, %v483
    %v500 = vmul.f32 %v484, 1.442695
    %v501 = vpow.pop %v500
    %v502 = vmul.f32 %v485, 1.442695
    %v503 = vpow.pop %v502
    %v504 = vmul.f32 %v486, 1.442695
    %v505 = vpow.pop %v504
    %v506 = vmul.f32 %v487, 1.442695
    %v507 = vpow.pop %v506
    %v508 = vmul.f32 %v488, 1.442695
    %v509 = vpow.pop %v508
    %v510 = vmul.f32 %v489, 1.442695
    %v511 = vpow.pop %v510
    %v512 = vmul.f32 %v490, 1.442695
    %v513 = vpow.pop %v512
    %v514 = vmul.f32 %v491, 1.442695
    %v515 = vpow.pop %v514
    %v516 = vmul.f32 %v492, 1.442695
    %v517 = vpow.pop %v516
    %v518 = vmul.f32 %v493, 1.442695
    %v519 = vpow.pop %v518
    %v520 = vmul.f32 %v494, 1.442695
    %v521 = vpow.pop %v520
    %v522 = vmul.f32 %v495, 1.442695
    %v523 = vpow.pop %v522
    %v524 = vmul.f32 %v496, 1.442695
    %v525 = vpow.pop %v524
    %v526 = vmul.f32 %v497, 1.442695
    %v527 = vpow.pop %v526
    %v528 = vmul.f32 %v498, 1.442695
    %v529 = vpow.pop %v528
    %v530 = vmul.f32 %v499, 1.442695
    %v531 = vpow.pop %v530
    %v532 = vpack.c.bf16 %v503, %v501
    %v533 = vpack.c.bf16 %v507, %v505
    %v534 = vpack.c.bf16 %v511, %v509
    %v535 = vpack.c.bf16 %v515, %v513
    %v536 = vpack.c.bf16 %v519, %v517
    %v537 = vpack.c.bf16 %v523, %v521
    %v538 = vpack.c.bf16 %v527, %v525
    %v539 = vpack.c.bf16 %v531, %v529
    %540 = vxpose.xlu0.c.b16.start [1/8] %v532, 128
    %541 = vxpose.xlu0.c.b16.cont [2/8] %v533, 128
    %542 = vxpose.xlu0.c.b16.cont [3/8] %v534, 128
    %543 = vxpose.xlu0.c.b16.cont [4/8] %v535, 128
    %544 = vxpose.xlu0.c.b16.cont [5/8] %v536, 128
    %545 = vxpose.xlu0.c.b16.cont [6/8] %v537, 128
    %546 = vxpose.xlu0.c.b16.cont [7/8] %v538, 128
    %547 = vxpose.xlu0.c.b16.end [8/8] %v539, 128
    %v548 = vpop.trf.xlu0
    %v549 = vpop.trf.xlu0
    %v550 = vpop.trf.xlu0
    %v551 = vpop.trf.xlu0
    %v552 = vpop.trf.xlu0
    %v553 = vpop.trf.xlu0
    %v554 = vpop.trf.xlu0
    %v555 = vpop.trf.xlu0
    %556 = vmatprep.subr.bf16.mxu0 0
    %557 = vmatpush1.bf16.msra.mxu0 %v159
    %558 = vmatprep.subr.bf16.mxu0 0
    %559 = vmatpush1.bf16.msra.mxu0 %v158
    %560 = vmatprep.subr.bf16.mxu0 0
    %561 = vmatpush1.bf16.msra.mxu0 %v157
    %562 = vmatprep.subr.bf16.mxu0 0
    %563 = vmatpush1.bf16.msra.mxu0 %v156
    %564 = vmatprep.subr.bf16.mxu0 0
    %565 = vmatpush1.bf16.msra.mxu0 %v155
    %566 = vmatprep.subr.bf16.mxu0 0
    %567 = vmatpush1.bf16.msra.mxu0 %v154
    %568 = vmatprep.subr.bf16.mxu0 0
    %569 = vmatpush1.bf16.msra.mxu0 %v153
    %570 = vmatprep.subr.bf16.mxu0 0
    %571 = vmatpush1.bf16.msra.mxu0 %v152
    %572 = vmatprep.subr.bf16.mxu0 0
    %573 = vmatpush2.bf16.msra.mxu0 0
    %574 = vmatprep.subr.bf16.mxu0 0
    %575 = vmatpush2.bf16.msra.mxu0 0
    %576 = vmatprep.subr.bf16.mxu0 0
    %577 = vmatpush2.bf16.msra.mxu0 0
    %578 = vmatprep.subr.bf16.mxu0 0
    %579 = vmatpush2.bf16.msra.mxu0 0
    %580 = vmatprep.subr.bf16.mxu0 0
    %581 = vmatpush2.bf16.msra.mxu0 0
    %582 = vmatprep.subr.bf16.mxu0 0
    %583 = vmatpush2.bf16.msra.mxu0 0
    %584 = vmatprep.subr.bf16.mxu0 0
    %585 = vmatpush2.bf16.msra.mxu0 0
    %586 = vmatprep.subr.bf16.mxu0 0
    %587 = vmatpush2.bf16.msra.mxu0 0
    %588 = vmatprep.mubr.bf16.mxu0 0
    %589 = vmatmul.mubr.bf16.gmra.mxu0 %v548
    %v590 = vpop.f32.mrf.mxu0
    %v591 = vadd.f32 0.0, %v590
    %v592 = vpop.f32.mrf.mxu0
    %v593 = vpop.f32.mrf.mxu0
    %v594 = vadd.f32 0.0, %v593
    %v595 = vpop.f32.mrf.mxu0
    %596 = vmatprep.mubr.bf16.mxu0 0
    %597 = vmatmul.mubr.bf16.gmra.mxu0 %v549
    %v598 = vpop.f32.mrf.mxu0
    %v599 = vadd.f32 0.0, %v598
    %v600 = vpop.f32.mrf.mxu0
    %v601 = vpop.f32.mrf.mxu0
    %v602 = vadd.f32 0.0, %v601
    %v603 = vpop.f32.mrf.mxu0
    %604 = vdwg.mxu0
    %v605 = vpack.c.bf16 %v38, %v37
    %v606 = vpack.c.bf16 %v40, %v39
    %v607 = vpack.c.bf16 %v42, %v41
    %v608 = vpack.c.bf16 %v44, %v43
    %v609 = vpack.c.bf16 %v46, %v45
    %v610 = vpack.c.bf16 %v48, %v47
    %v611 = vpack.c.bf16 %v50, %v49
    %v612 = vpack.c.bf16 %v52, %v51
    %613 = vmatprep.subr.bf16.mxu0 0
    %614 = vmatpush1.bf16.msra.mxu0 %v612
    %615 = vmatprep.subr.bf16.mxu0 0
    %616 = vmatpush1.bf16.msra.mxu0 %v611
    %617 = vmatprep.subr.bf16.mxu0 0
    %618 = vmatpush1.bf16.msra.mxu0 %v610
    %619 = vmatprep.subr.bf16.mxu0 0
    %620 = vmatpush1.bf16.msra.mxu0 %v609
    %621 = vmatprep.subr.bf16.mxu0 0
    %622 = vmatpush1.bf16.msra.mxu0 %v608
    %623 = vmatprep.subr.bf16.mxu0 0
    %624 = vmatpush1.bf16.msra.mxu0 %v607
    %625 = vmatprep.subr.bf16.mxu0 0
    %626 = vmatpush1.bf16.msra.mxu0 %v606
    %627 = vmatprep.subr.bf16.mxu0 0
    %628 = vmatpush1.bf16.msra.mxu0 %v605
    %629 = vmatprep.subr.bf16.mxu0 0
    %630 = vmatpush2.bf16.msra.mxu0 0
    %631 = vmatprep.subr.bf16.mxu0 0
    %632 = vmatpush2.bf16.msra.mxu0 0
    %633 = vmatprep.subr.bf16.mxu0 0
    %634 = vmatpush2.bf16.msra.mxu0 0
    %635 = vmatprep.subr.bf16.mxu0 0
    %636 = vmatpush2.bf16.msra.mxu0 0
    %637 = vmatprep.subr.bf16.mxu0 0
    %638 = vmatpush2.bf16.msra.mxu0 0
    %639 = vmatprep.subr.bf16.mxu0 0
    %640 = vmatpush2.bf16.msra.mxu0 0
    %641 = vmatprep.subr.bf16.mxu0 0
    %642 = vmatpush2.bf16.msra.mxu0 0
    %643 = vmatprep.subr.bf16.mxu0 0
    %644 = vmatpush2.bf16.msra.mxu0 0
    %645 = vmatprep.mubr.bf16.mxu0 0
    %646 = vmatmul.mubr.bf16.gmra.mxu0 %v548
    %v647 = vpop.f32.mrf.mxu0
    %v648 = vadd.f32 0.0, %v647
    %v649 = vpop.f32.mrf.mxu0
    %v650 = vpop.f32.mrf.mxu0
    %v651 = vadd.f32 0.0, %v650
    %v652 = vpop.f32.mrf.mxu0
    %653 = vmatprep.mubr.bf16.mxu0 0
    %654 = vmatmul.mubr.bf16.gmra.mxu0 %v549
    %v655 = vpop.f32.mrf.mxu0
    %v656 = vadd.f32 0.0, %v655
    %v657 = vpop.f32.mrf.mxu0
    %v658 = vpop.f32.mrf.mxu0
    %v659 = vadd.f32 0.0, %v658
    %v660 = vpop.f32.mrf.mxu0
    %661 = vdwg.mxu0
    %v662 = vrcp.pop %v648
    %v663 = vrcp.pop %v651
    %v664 = vrcp.pop %v656
    %v665 = vrcp.pop %v659
    %v666 = vmul.f32 %v591, %v662
    %v667 = vmul.f32 %v594, %v663
    %v668 = vmul.f32 %v599, %v664
    %v669 = vmul.f32 %v602, %v665
    %v670 = vlaneseq
    %v671 = vshrl.u32 %v670, 7
    %v672 = vsub.s32 0, %v671
    %v673 = vrot.slane %v53, %v672
    %v674 = vadd.f32 %v666, %v673
    %v675 = vadd.f32 %v667, %v673
    %v676 = vadd.f32 %v668, %v673
    %v677 = vadd.f32 %v669, %v673
    %678 = vst.msk [vmem:[#allocation2] sm:$0xff] %vm78, %v674
    %679 = vst.msk [vmem:[#allocation2 + $0x8] sm:$0xff] %vm78, %v675
    %680 = vst.msk [vmem:[#allocation2 + $0x10] sm:$0xff] %vm78, %v676
    %681 = vst.msk [vmem:[#allocation2 + $0x18] sm:$0xff] %vm78, %v677
    // Predicated region
    $region10: #{gat_conv.1} parent=1 // pred_check
      _
    $region11: #{gat_conv.1} parent=1 // pred_check_branch
      %683 = sbr.rel (0) target = $region13
    $region12: #{gat_conv.1} parent=1 // pred_region
      %s685 = ssub.s32 512, 512
      %686 = vsyncadd [#allocation3], %s685
      %s687 = sshll.u32 [#allocation2], 4
      %s688 = int_to_ptr.vmem [resolvable:$true] %s687
      %693 = dma.vmem_to_hbm [thread:$0]  %s688, 512, %s2, [#allocation3], 128, 128, 8
    $region13: #{gat_conv.1} parent=1 // pred_fallthru
      _
    // Predicated region
    $region14: #{gat_conv.1} parent=1 // pred_check
      _
    $region15: #{gat_conv.1} parent=1 // pred_check_branch
      %695 = sbr.rel (0) target = $region17
    $region16: #{gat_conv.1} parent=1 // pred_region
      %696 = dma.done [#allocation3], 512
    $region17: #{gat_conv.1} parent=1 // pred_fallthru
      _
    %697 = vsyncpa [#allocation3], 1

</llo_original>
